<compile_context>
chip_gen: v7x
topology: tpu7x:2x2x1
jax: 0.10.0
libtpu: 0.0.40
codegen_flags: <defaults>
</compile_context>

<pallas_src>
import functools

import jax
import jax.numpy as jnp
from jax.experimental import pallas as pl
from jax.experimental.pallas import tpu as pltpu


def _map_loss_l2_pos_max_kernel(pred_ref, omap_ref, out_ref, *scratch,
                                normalize, cache_pred, padded, true_t, tile_t):
    phase = pl.program_id(1)
    j = pl.program_id(2)
    n_t = pl.num_programs(2)
    loss_phase = 1 if normalize else 0

    rowmax_acc = scratch[0] if normalize else None
    pred_cache = scratch[1] if cache_pred else None

    @pl.when((phase == 0) & (j == 0))
    def _init():
        out_ref[...] = jnp.zeros_like(out_ref)        # squared terms are >= 0
        if normalize:
            rowmax_acc[...] = jnp.full(rowmax_acc.shape, -jnp.inf, rowmax_acc.dtype)

    if normalize:
        @pl.when(phase == 0)
        def _row_max():
            if cache_pred:
                pred_cache[j] = pred_ref[...]          # keep input dtype in cache
            x = pred_ref[...].astype(jnp.float32)
            if padded:
                col = j * tile_t + jax.lax.broadcasted_iota(jnp.int32, x.shape, 1)
                x = jnp.where(col < true_t, x, jnp.float32(-jnp.inf))
            rowmax_acc[...] = jnp.maximum(
                rowmax_acc[...], jnp.max(x, axis=1, keepdims=True))

        @pl.when((phase == 0) & (j == n_t - 1))
        def _to_reciprocal():
            # Hoisted once: phase 1 is then a single broadcast multiply per tile.
            # NOTE: if a row max is ~ -1e-6 this is +/-inf, matching the PyTorch
            # divide exactly -- do not "fix" without breaking parity.
            rowmax_acc[...] = 1.0 / (rowmax_acc[...] + jnp.float32(1e-6))

    @pl.when(phase == loss_phase)
    def _loss_max():
        if cache_pred:
            pred = pred_cache[j].astype(jnp.float32)
        else:
            pred = pred_ref[...].astype(jnp.float32)
        omap = omap_ref[...].astype(jnp.float32)
        if normalize:
            pred = pred * rowmax_acc[...]              # (block_b,1) broadcast
        d = omap - pred * omap
        term = d * d
        if padded:
            col = j * tile_t + jax.lax.broadcasted_iota(jnp.int32, term.shape, 1)
            term = jnp.where(col < true_t, term, jnp.float32(0.0))
        out_ref[...] = jnp.maximum(
            out_ref[...], jnp.max(term, axis=1, keepdims=True))


def _choose_tile_t(block_b, T, itemsize, target_step_bytes, stream_budget_bytes):
    # Per-step streamed bytes (loss phase) = 2 arrays * block_b * tile_t * itemsize.
    # Double-buffered footprint            = 2 arrays * 2 bufs * block_b * tile_t * itemsize.
    cap_target = max(128, target_step_bytes // (2 * block_b * itemsize))
    cap_budget = max(128, stream_budget_bytes // (4 * block_b * itemsize))
    cap = min(cap_target, cap_budget)
    if T <= cap:
        return T                              # single time tile (block == full dim)
    return max(128, (cap // 128) * 128)       # lane-aligned partial blocks


def map_loss_l2_pos_max(onset_map_pred, onset_map, *, normalize=True,
                        block_b=None, tile_t=None,
                        target_step_bytes=8 << 20,
                        vmem_budget_bytes=48 << 20):
    """Pallas implementation of MapLossL2PosMax.forward. Inputs: (B, T)."""
    B, T = onset_map_pred.shape
    assert onset_map.shape == (B, T)
    itemsize = onset_map_pred.dtype.itemsize

    # --- batch blocking: sublane-aligned row blocks on a "parallel" grid axis.
    if block_b is None:
        if B > 8 and B % 8 == 0:
            block_b = max(8, ((B // 2) // 8) * 8)   # >=2 blocks -> one per TC on v7x
        else:
            block_b = B
    block_b = int(block_b)
    if block_b != B:
        block_b = max(8, (min(block_b, B) // 8) * 8)   # sublane alignment
    n_b = -(-B // block_b)

    # --- time tiling (itemsize-aware, consistent with the VMEM budget).
    if tile_t is None:
        tile_t = _choose_tile_t(block_b, T, itemsize, target_step_bytes,
                                vmem_budget_bytes // 2)
    tile_t = int(min(tile_t, T))
    if tile_t < T:
        tile_t = max(128, (tile_t // 128) * 128)
    n_t = -(-T // tile_t)
    padded = (n_t * tile_t != T)               # handled in-kernel; no jnp.pad

    # --- pred cache decision (only useful when normalize needs a 2nd pass).
    stream_fp = 4 * block_b * tile_t * itemsize            # 2 arrays x 2 buffers
    cache_bytes = n_t * tile_t * block_b * itemsize
    cache_pred = bool(normalize and n_t > 1 and
                      cache_bytes <= vmem_budget_bytes - stream_fp - (1 << 20))

    n_phase = 2 if normalize else 1
    vmem_limit = int(min(max(32 << 20,
                             stream_fp + (cache_bytes if cache_pred else 0) + (4 << 20)),
                         56 << 20))            # stays under v7x's 64 MiB physical VMEM

    kernel = functools.partial(
        _map_loss_l2_pos_max_kernel,
        normalize=normalize, cache_pred=cache_pred,
        padded=padded, true_t=T, tile_t=tile_t)

    if normalize:
        # Phase 0: omap pinned to block 0 (no traffic; it is phase 1's first block).
        omap_index_map = lambda b, p, j: (b, j * p)
        if cache_pred:
            # Phase 1: pred pinned to its last (already resident) block -> no 2nd pass.
            pred_index_map = lambda b, p, j: (b, j + p * (n_t - 1 - j))
        else:
            pred_index_map = lambda b, p, j: (b, j)     # streamed twice (cache too big)
    else:
        omap_index_map = lambda b, p, j: (b, j)
        pred_index_map = lambda b, p, j: (b, j)

    scratch_shapes = []
    if normalize:
        scratch_shapes.append(pltpu.VMEM((block_b, 1), jnp.float32))     # row max / recip
    if cache_pred:
        scratch_shapes.append(pltpu.VMEM((n_t, block_b, tile_t), onset_map_pred.dtype))

    out = pl.pallas_call(
        kernel,
        out_shape=jax.ShapeDtypeStruct((B, 1), jnp.float32),
        grid_spec=pltpu.PrefetchScalarGridSpec(
            num_scalar_prefetch=0,
            grid=(n_b, n_phase, n_t),
            in_specs=[
                pl.BlockSpec((block_b, tile_t), pred_index_map),
                pl.BlockSpec((block_b, tile_t), omap_index_map),
            ],
            out_specs=pl.BlockSpec((block_b, 1), lambda b, p, j: (b, 0)),
            scratch_shapes=scratch_shapes,
        ),
        compiler_params=pltpu.CompilerParams(
            dimension_semantics=("parallel", "arbitrary", "arbitrary"),
            vmem_limit_bytes=vmem_limit,
        ),
    )(onset_map_pred, onset_map)
    return jnp.mean(out)                       # (B,1) per-row maxima -> scalar


def _reference(onset_map_pred, onset_map, normalize=True):
    pred = onset_map_pred.astype(jnp.float32)
    omap = onset_map.astype(jnp.float32)
    if normalize:
        maxes = jnp.max(pred, axis=1, keepdims=True)
        pred = pred / (maxes + jnp.float32(1e-6))
    pos_loc_max = jnp.max((omap - pred * omap) ** 2, axis=1)
    return jnp.mean(pos_loc_max)


if __name__ == "__main__":
    key = jax.random.PRNGKey(0)
    k = jax.random.split(key, 6)

    # Test 1: basic path -- single time tile, normalize=True, no mask / no cache.
    B, T = 8, 256
    pred = jax.random.uniform(k[0], (B, T), jnp.float32, 0.0, 1.0)
    omap = jax.random.uniform(k[1], (B, T), jnp.float32, 0.0, 1.0)
    loss = jax.block_until_ready(map_loss_l2_pos_max(pred, omap))
    ref = _reference(pred, omap)
    assert jnp.allclose(loss, ref, rtol=1e-5, atol=1e-6), (loss, ref)

    # Test 2: ragged T (in-kernel mask, no wrapper pad), multi time tile,
    # pred cached in VMEM, batch split into two parallel row blocks.
    # All-negative predictions exercise the -inf-masked row max.
    B2, T2 = 16, 200
    pred2 = jax.random.uniform(k[2], (B2, T2), jnp.float32, -1.0, -0.1)
    omap2 = jax.random.uniform(k[3], (B2, T2), jnp.float32, 0.0, 1.0)
    loss2 = jax.block_until_ready(map_loss_l2_pos_max(pred2, omap2, tile_t=128))
    ref2 = _reference(pred2, omap2)
    assert jnp.allclose(loss2, ref2, rtol=1e-5, atol=1e-6), (loss2, ref2)

    # Test 3: same shapes but cache disabled (tiny budget) -> pred streamed twice.
    loss3 = jax.block_until_ready(
        map_loss_l2_pos_max(pred2, omap2, tile_t=128, vmem_budget_bytes=1 << 20))
    assert jnp.allclose(loss3, ref2, rtol=1e-5, atol=1e-6), (loss3, ref2)

    # Test 4: normalize=False (single-phase grid).
    loss4 = jax.block_until_ready(map_loss_l2_pos_max(pred, omap, normalize=False))
    ref4 = _reference(pred, omap, normalize=False)
    assert jnp.allclose(loss4, ref4, rtol=1e-5, atol=1e-6), (loss4, ref4)

    # Test 5: bf16 inputs (itemsize-aware tiling; kernel upcasts to f32 internally).
    pred5 = pred.astype(jnp.bfloat16)
    omap5 = omap.astype(jnp.bfloat16)
    loss5 = jax.block_until_ready(map_loss_l2_pos_max(pred5, omap5))
    ref5 = _reference(pred5.astype(jnp.float32), omap5.astype(jnp.float32))
    assert jnp.allclose(loss5, ref5, rtol=1e-5, atol=1e-5), (loss5, ref5)

    print("KERNEL_OK")
</pallas_src>

<mosaic_0001>
module attributes {stable_mosaic.version = 11 : i64} {
  func.func @_map_loss_l2_pos_max_kernel(%arg0: i32, %arg1: i32, %arg2: i32, %arg3: memref<8x256xf32, #tpu.memory_space<vmem>>, %arg4: memref<8x256xf32, #tpu.memory_space<vmem>>, %arg5: memref<8x1xf32, #tpu.memory_space<vmem>>, %arg6: memref<8x1xf32, #tpu.memory_space<vmem>>) attributes {dimension_semantics = [#tpu.dimension_semantics<parallel>, #tpu.dimension_semantics<arbitrary>, #tpu.dimension_semantics<arbitrary>], iteration_bounds = array<i64: 1, 2, 1>, scalar_prefetch = 0 : i64, scratch_operands = 1 : i64, tpu.core_type = #tpu.core_type<tc>, window_params = [{transform_indices = @transform_0, window_bounds = array<i64: 8, 256>}, {transform_indices = @transform_1, window_bounds = array<i64: 8, 256>}, {transform_indices = @transform_2, window_bounds = array<i64: 8, 1>}]} {
    %c0_i32 = arith.constant 0 : i32
    %0 = arith.cmpi eq, %arg1, %c0_i32 : i32
    %c0_i32_0 = arith.constant 0 : i32
    %1 = arith.cmpi eq, %arg2, %c0_i32_0 : i32
    %2 = arith.andi %0, %1 : i1
    %3 = arith.extui %2 : i1 to i32
    %c0_i32_1 = arith.constant 0 : i32
    %4 = arith.cmpi ne, %3, %c0_i32_1 : i32
    scf.if %4 {
      %cst = arith.constant 0.000000e+00 : f32
      %16 = vector.broadcast %cst : f32 to vector<8x1xf32>
      %c0 = arith.constant 0 : index
      %c0_8 = arith.constant 0 : index
      %17 = vector.load %arg5[%c0, %c0_8] : memref<8x1xf32, #tpu.memory_space<vmem>>, vector<8x1xf32>
      tpu.vector_store %arg5[%c0, %c0_8], %16 {strides = array<i32>} : memref<8x1xf32, #tpu.memory_space<vmem>>, vector<8x1xf32>,
      %cst_9 = arith.constant 0xFF800000 : f32
      %18 = vector.broadcast %cst_9 : f32 to vector<8x1xf32>
      %c0_10 = arith.constant 0 : index
      %c0_11 = arith.constant 0 : index
      %19 = vector.load %arg6[%c0_10, %c0_11] : memref<8x1xf32, #tpu.memory_space<vmem>>, vector<8x1xf32>
      tpu.vector_store %arg6[%c0_10, %c0_11], %18 {strides = array<i32>} : memref<8x1xf32, #tpu.memory_space<vmem>>, vector<8x1xf32>,
    } else {
    }
    %c0_i32_2 = arith.constant 0 : i32
    %5 = arith.cmpi eq, %arg1, %c0_i32_2 : i32
    %6 = arith.extui %5 : i1 to i32
    %c0_i32_3 = arith.constant 0 : i32
    %7 = arith.cmpi ne, %6, %c0_i32_3 : i32
    scf.if %7 {
      %c0 = arith.constant 0 : index
      %c0_8 = arith.constant 0 : index
      %16 = vector.load %arg3[%c0, %c0_8] : memref<8x256xf32, #tpu.memory_space<vmem>>, vector<8x256xf32>
      %c0_9 = arith.constant 0 : index
      %c0_10 = arith.constant 0 : index
      %17 = vector.load %arg6[%c0_9, %c0_10] : memref<8x1xf32, #tpu.memory_space<vmem>>, vector<8x1xf32>
      %cst = arith.constant dense<0xFF800000> : vector<8xf32>
      %18 = vector.multi_reduction <maximumf>, %16, %cst [1] : vector<8x256xf32> to vector<8xf32>
      %19 = vector.shape_cast %18 : vector<8xf32> to vector<8x1xf32>
      %20 = arith.maximumf %17, %19 : vector<8x1xf32>
      %c0_11 = arith.constant 0 : index
      %c0_12 = arith.constant 0 : index
      %21 = vector.load %arg6[%c0_11, %c0_12] : memref<8x1xf32, #tpu.memory_space<vmem>>, vector<8x1xf32>
      tpu.vector_store %arg6[%c0_11, %c0_12], %20 {strides = array<i32>} : memref<8x1xf32, #tpu.memory_space<vmem>>, vector<8x1xf32>,
    } else {
    }
    %c0_i32_4 = arith.constant 0 : i32
    %8 = arith.cmpi eq, %arg1, %c0_i32_4 : i32
    %c0_i32_5 = arith.constant 0 : i32
    %9 = arith.cmpi eq, %arg2, %c0_i32_5 : i32
    %10 = arith.andi %8, %9 : i1
    %11 = arith.extui %10 : i1 to i32
    %c0_i32_6 = arith.constant 0 : i32
    %12 = arith.cmpi ne, %11, %c0_i32_6 : i32
    scf.if %12 {
      %c0 = arith.constant 0 : index
      %c0_8 = arith.constant 0 : index
      %16 = vector.load %arg6[%c0, %c0_8] : memref<8x1xf32, #tpu.memory_space<vmem>>, vector<8x1xf32>
      %cst = arith.constant 9.99999997E-7 : f32
      %17 = vector.broadcast %cst : f32 to vector<8x1xf32>
      %18 = arith.addf %16, %17 : vector<8x1xf32>
      %cst_9 = arith.constant 1.000000e+00 : f32
      %19 = vector.broadcast %cst_9 : f32 to vector<8x1xf32>
      %20 = arith.divf %19, %18 : vector<8x1xf32>
      %c0_10 = arith.constant 0 : index
      %c0_11 = arith.constant 0 : index
      %21 = vector.load %arg6[%c0_10, %c0_11] : memref<8x1xf32, #tpu.memory_space<vmem>>, vector<8x1xf32>
      tpu.vector_store %arg6[%c0_10, %c0_11], %20 {strides = array<i32>} : memref<8x1xf32, #tpu.memory_space<vmem>>, vector<8x1xf32>,
    } else {
    }
    %c1_i32 = arith.constant 1 : i32
    %13 = arith.cmpi eq, %arg1, %c1_i32 : i32
    %14 = arith.extui %13 : i1 to i32
    %c0_i32_7 = arith.constant 0 : i32
    %15 = arith.cmpi ne, %14, %c0_i32_7 : i32
    scf.if %15 {
      %c0 = arith.constant 0 : index
      %c0_8 = arith.constant 0 : index
      %16 = vector.load %arg3[%c0, %c0_8] : memref<8x256xf32, #tpu.memory_space<vmem>>, vector<8x256xf32>
      %c0_9 = arith.constant 0 : index
      %c0_10 = arith.constant 0 : index
      %17 = vector.load %arg4[%c0_9, %c0_10] : memref<8x256xf32, #tpu.memory_space<vmem>>, vector<8x256xf32>
      %c0_11 = arith.constant 0 : index
      %c0_12 = arith.constant 0 : index
      %18 = vector.load %arg6[%c0_11, %c0_12] : memref<8x1xf32, #tpu.memory_space<vmem>>, vector<8x1xf32>
      %19 = vector.broadcast %18 : vector<8x1xf32> to vector<8x256xf32>
      %20 = arith.mulf %16, %19 : vector<8x256xf32>
      %21 = arith.mulf %20, %17 : vector<8x256xf32>
      %22 = arith.subf %17, %21 : vector<8x256xf32>
      %23 = arith.mulf %22, %22 : vector<8x256xf32>
      %c0_13 = arith.constant 0 : index
      %c0_14 = arith.constant 0 : index
      %24 = vector.load %arg5[%c0_13, %c0_14] : memref<8x1xf32, #tpu.memory_space<vmem>>, vector<8x1xf32>
      %cst = arith.constant dense<0xFF800000> : vector<8xf32>
      %25 = vector.multi_reduction <maximumf>, %23, %cst [1] : vector<8x256xf32> to vector<8xf32>
      %26 = vector.shape_cast %25 : vector<8xf32> to vector<8x1xf32>
      %27 = arith.maximumf %24, %26 : vector<8x1xf32>
      %c0_15 = arith.constant 0 : index
      %c0_16 = arith.constant 0 : index
      %28 = vector.load %arg5[%c0_15, %c0_16] : memref<8x1xf32, #tpu.memory_space<vmem>>, vector<8x1xf32>
      tpu.vector_store %arg5[%c0_15, %c0_16], %27 {strides = array<i32>} : memref<8x1xf32, #tpu.memory_space<vmem>>, vector<8x1xf32>,
    } else {
    }
    return
  }
  func.func @transform_0(%arg0: i32, %arg1: i32, %arg2: i32) -> (i32, i32) {
    %c0_i32 = arith.constant 0 : i32
    return %arg0, %arg2 : i32, i32
  }
  func.func @transform_1(%arg0: i32, %arg1: i32, %arg2: i32) -> (i32, i32) {
    %0 = arith.muli %arg2, %arg1 : i32
    %c0_i32 = arith.constant 0 : i32
    return %arg0, %0 : i32, i32
  }
  func.func @transform_2(%arg0: i32, %arg1: i32, %arg2: i32) -> (i32, i32) {
    %c0_i32 = arith.constant 0 : i32
    %c0_i32_0 = arith.constant 0 : i32
    return %arg0, %c0_i32 : i32, i32
  }
}

</mosaic_0001>

<llo_original>
// kernel: tpu_custom_call.1
$region0: #{tpu_custom_call.1}
  #allocation0 [shape = 'u32[]', space=smem, size = 0x4, offset = 0x4, fixed_abs, tag = 'smem constant byte address 0x4 - core index']
  #allocation1 [shape = 'u32[144,128]{1,0:T(1,128)}', space=vmem, size = 0x12000, scoped, tag = 'internal scratch']
  #allocation2 [shape = 'f32[8,1]{1,0:T(8,128)}', space=vmem, size = 0x1000, scoped, tag = 'scratch operand']
  %s0 = inlined_call_operand.hbm [shape: f32[8,256], index: 0, kind: input, shape index: {}]
  %s1 = inlined_call_operand.hbm [shape: f32[8,256], index: 1, kind: input, shape index: {}]
  %s2 = inlined_call_operand.vmem [shape: f32[8,1], index: 2, kind: output, shape index: {}]
  %s3 = sld [smem:[#allocation0]]
  $region65: #{tpu_custom_call.1} parent=0
    _
  %s5 = ssub.s32 1, %s3
  %s6 = scalar_select 0, %s5, %s3
  $region1: #{tpu_custom_call.1} parent=0
    #allocation3 [shape = 'u8[8192]{0}', space=vmem, size = 0x2000, scoped, tag = 'input window, operand 0, single buffered']
    #allocation4 [shape = 's32[2]{0}', space=sflag, size = 0x8, scoped, tag = 'scoped memory for tpu_custom_call.1']
    #allocation5 [shape = 'u8[16384]{0}', space=vmem, size = 0x4000, scoped, tag = 'input window, operand 1']
    #allocation6 [shape = 's32[2]{0}', space=sflag, size = 0x8, scoped, tag = 'scoped memory for tpu_custom_call.1']
    %7 = vsyncpa [#allocation4], 0
    %8 = vsyncpa [#allocation6], 0
    %s9 = scalar_lea.sflag [#allocation6], 1
    %10 = vsyncpa %s9, 0
    loop: start=0, step=1, limit=4
    $region2: #{tpu_custom_call.1} parent=1 // loop_pre_header
      _
    $region3: #{tpu_custom_call.1} parent=1 // loop_header
      %s12 = sphi 0, %s16
      %p13 = scmp.ge.s32.totalorder %s12, 4
      %s19 = sphi 0, %s38
      %s20 = sphi 0, %s34
      %s21 = sphi 0, %s30
      %s22 = sphi 0, %s19
      %s23 = sphi 0, %s20
      %s24 = sphi 0, %s21
      %s25 = sphi 0, %s22
      %s26 = sphi 0, %s23
      %s27 = sphi 0, %s24
      %s43 = sphi 0, %s45
      %s46 = sphi 0, %s43
      %s47 = sphi 0, %s46
      %s63 = sphi 0, %s47
      %s73 = sphi 0, %s75
      %s76 = sphi 0, %s73
      %s77 = sphi 0, %s76
      %s93 = sphi 0, %s77
      %s99 = sphi 0, %s101
      %s102 = sphi 0, %s99
      %s103 = sphi 0, %s102
      %s119 = sphi 0, %s103
    $region4: #{tpu_custom_call.1} parent=1 // loop_header_branch
      %15 = sbr.rel (%p13) target = $region8
    $region5: #{tpu_custom_call.1} parent=1 // loop_body
      %s17 = ssub.s32 %s12, 1
      %s18 = ssub.s32 %s12, 2
      %s28 = sadd.s32 1, %s21
      %p29 = scmp.ge.s32.totalorder %s28, 1
      %s30 = scalar_select %p29, 0, %s28
      %s31 = sadd.s32 1, %s20
      %s32 = scalar_select %p29, %s31, %s20
      %p33 = scmp.ge.s32.totalorder %s32, 2
      %s34 = scalar_select %p33, 0, %s32
      %s35 = sadd.s32 1, %s19
      %s36 = scalar_select %p33, %s35, %s19
      %p37 = scmp.ge.s32.totalorder %s36, 1
      %s38 = scalar_select %p37, 0, %s36
      %s39 = ssub.s32 %s19, %s38
      %s40 = ssub.s32 %s21, %s30
      %s41 = sor.u32 %s39, %s40
      %p42 = scmp.eq.s32.totalorder %s41, 0
      %s44 = sadd.s32 %s43, 1
      %s45 = scalar_select %p42, %s43, %s44
      %p48 = pneg %p42
      %p49 = scmp.eq.s32.totalorder %s12, 1
      %p50 = por %p48, %p49
      %p51 = scmp.ne.s32.totalorder %s43, %s46
      %p52 = scmp.eq.s32.totalorder %s12, 0
      %p53 = por %p51, %p52
      %p54 = scmp.ne.s32.totalorder %s43, %s46
      %p55 = scmp.eq.s32.totalorder %s17, 1
      %p56 = por %p54, %p55
      %p57 = scmp.ne.s32.totalorder %s46, %s47
      %p58 = scmp.eq.s32.totalorder %s17, 0
      %p59 = por %p57, %p58
      %p60 = scmp.ne.s32.totalorder %s46, %s47
      %p61 = scmp.eq.s32.totalorder %s18, 1
      %p62 = por %p60, %p61
      %p64 = scmp.ne.s32.totalorder %s47, %s63
      %p65 = scmp.eq.s32.totalorder %s18, 0
      %p66 = por %p64, %p65
      %s67 = smul.u32 %s21, %s20
      %s68 = smul.u32 %s30, %s34
      %s69 = ssub.s32 %s19, %s38
      %s70 = ssub.s32 %s67, %s68
      %s71 = sor.u32 %s69, %s70
      %p72 = scmp.eq.s32.totalorder %s71, 0
      %s74 = sadd.s32 %s73, 1
      %s75 = scalar_select %p72, %s73, %s74
      %p78 = pneg %p72
      %p79 = scmp.eq.s32.totalorder %s12, 1
      %p80 = por %p78, %p79
      %p81 = scmp.ne.s32.totalorder %s73, %s76
      %p82 = scmp.eq.s32.totalorder %s12, 0
      %p83 = por %p81, %p82
      %p84 = scmp.ne.s32.totalorder %s73, %s76
      %p85 = scmp.eq.s32.totalorder %s17, 1
      %p86 = por %p84, %p85
      %p87 = scmp.ne.s32.totalorder %s76, %s77
      %p88 = scmp.eq.s32.totalorder %s17, 0
      %p89 = por %p87, %p88
      %p90 = scmp.ne.s32.totalorder %s76, %s77
      %p91 = scmp.eq.s32.totalorder %s18, 1
      %p92 = por %p90, %p91
      %p94 = scmp.ne.s32.totalorder %s77, %s93
      %p95 = scmp.eq.s32.totalorder %s18, 0
      %p96 = por %p94, %p95
      %s97 = ssub.s32 %s19, %s38
      %p98 = scmp.eq.s32.totalorder %s97, 0
      %s100 = sadd.s32 %s99, 1
      %s101 = scalar_select %p98, %s99, %s100
      %p104 = pneg %p98
      %p105 = scmp.eq.s32.totalorder %s12, 1
      %p106 = por %p104, %p105
      %p107 = scmp.ne.s32.totalorder %s99, %s102
      %p108 = scmp.eq.s32.totalorder %s12, 0
      %p109 = por %p107, %p108
      %p110 = scmp.ne.s32.totalorder %s99, %s102
      %p111 = scmp.eq.s32.totalorder %s17, 1
      %p112 = por %p110, %p111
      %p113 = scmp.ne.s32.totalorder %s102, %s103
      %p114 = scmp.eq.s32.totalorder %s17, 0
      %p115 = por %p113, %p114
      %p116 = scmp.ne.s32.totalorder %s102, %s103
      %p117 = scmp.eq.s32.totalorder %s18, 1
      %p118 = por %p116, %p117
      %p120 = scmp.ne.s32.totalorder %s103, %s119
      %p121 = scmp.eq.s32.totalorder %s18, 0
      %p122 = por %p120, %p121
      %p123 = scmp.le.s32.totalorder 1, %s12
      %p124 = scmp.lt.s32.totalorder %s12, 3
      %p125 = pnand %p123, %p124
      %p126 = pneg %p125
      // Predicated region
      $region9: #{tpu_custom_call.1} parent=5 // pred_check
        _
      $region10: #{tpu_custom_call.1} parent=5 // pred_check_branch
        %128 = sbr.rel (%p125) target = $region12
      $region11: #{tpu_custom_call.1} parent=5 // pred_region
        %s129 = ssub.s32 %s12, 1
        // Predicated region
        $region13: #{tpu_custom_call.1} parent=11 // pred_check
          %p130 = pneg %p59
        $region14: #{tpu_custom_call.1} parent=11 // pred_check_branch
          %132 = sbr.rel (%p130) target = $region16
        $region15: #{tpu_custom_call.1} parent=11 // pred_region
          %s133 = smul.u32 2, %s24
          %s135 = ssub.s32 256, 256
          %136 = vsyncadd [#allocation4], %s135
          %s137 = smul.addr %s22, 2
          %s138 = sadd.s32 %s133, %s137
          %s139 = smul.addr %s138, 128
          %s140 = scalar_lea.hbm %s0, %s139
          %s142 = sshll.u32 [#allocation3], 4
          %s143 = int_to_ptr.vmem [resolvable:$true] %s142
          %145 = dma.hbm_to_vmem [thread:$0]  %s140, 256, %s143, [#allocation4]
        $region16: #{tpu_custom_call.1} parent=11 // pred_fallthru
          _
      $region12: #{tpu_custom_call.1} parent=5 // pred_fallthru
        _
      %p146 = scmp.lt.s32.totalorder %s12, 2
      // Predicated region
      $region17: #{tpu_custom_call.1} parent=5 // pred_check
        %p147 = pneg %p146
      $region18: #{tpu_custom_call.1} parent=5 // pred_check_branch
        %149 = sbr.rel (%p147) target = $region20
      $region19: #{tpu_custom_call.1} parent=5 // pred_region
        // Predicated region
        $region21: #{tpu_custom_call.1} parent=19 // pred_check
          %p150 = pneg %p83
        $region22: #{tpu_custom_call.1} parent=19 // pred_check_branch
          %152 = sbr.rel (%p150) target = $region24
        $region23: #{tpu_custom_call.1} parent=19 // pred_region
          %s153 = sand.u32 %s73, 1
          %s154 = scalar_lea.sflag [#allocation6], %s153
          %s155 = sand.u32 %s73, 1
          %s156 = smul.addr %s155, 16
          %s157 = scalar_lea.vmem [#allocation5], %s156
          %s158 = smul.u32 %s21, %s20
          %s159 = smul.u32 2, %s158
          %s161 = ssub.s32 256, 256
          %162 = vsyncadd %s154, %s161
          %s163 = smul.addr %s19, 2
          %s164 = sadd.s32 %s159, %s163
          %s165 = smul.addr %s164, 128
          %s166 = scalar_lea.hbm %s1, %s165
          %s168 = sshll.u32 %s157, 4
          %s169 = int_to_ptr.vmem [resolvable:$true] %s168
          %171 = dma.hbm_to_vmem [thread:$0]  %s166, 256, %s169, %s154
        $region24: #{tpu_custom_call.1} parent=19 // pred_fallthru
          _
      $region20: #{tpu_custom_call.1} parent=5 // pred_fallthru
        _
      %p172 = scmp.le.s32.totalorder 1, %s12
      %p173 = scmp.lt.s32.totalorder %s12, 3
      %p174 = pnand %p172, %p173
      %p175 = pneg %p174
      // Predicated region
      $region25: #{tpu_custom_call.1} parent=5 // pred_check
        _
      $region26: #{tpu_custom_call.1} parent=5 // pred_check_branch
        %177 = sbr.rel (%p174) target = $region28
      $region27: #{tpu_custom_call.1} parent=5 // pred_region
        %s178 = ssub.s32 %s12, 1
        // Predicated region
        $region29: #{tpu_custom_call.1} parent=27 // pred_check
          %p179 = pneg %p59
        $region30: #{tpu_custom_call.1} parent=27 // pred_check_branch
          %181 = sbr.rel (%p179) target = $region32
        $region31: #{tpu_custom_call.1} parent=27 // pred_region
          %182 = dma.done [#allocation4], 256
        $region32: #{tpu_custom_call.1} parent=27 // pred_fallthru
          _
        %s183 = sand.u32 %s76, 1
        %s184 = scalar_lea.sflag [#allocation6], %s183
        %s185 = sand.u32 %s76, 1
        %s186 = smul.addr %s185, 16
        %s187 = scalar_lea.vmem [#allocation5], %s186
        // Predicated region
        $region33: #{tpu_custom_call.1} parent=27 // pred_check
          %p188 = pneg %p89
        $region34: #{tpu_custom_call.1} parent=27 // pred_check_branch
          %190 = sbr.rel (%p188) target = $region36
        $region35: #{tpu_custom_call.1} parent=27 // pred_region
          %191 = dma.done %s184, 256
        $region36: #{tpu_custom_call.1} parent=27 // pred_fallthru
          _
        %p192 = pneg %p59
        %p193 = pneg %p56
        %s194 = sand.u32 %s76, 1
        %s195 = scalar_lea.sflag [#allocation6], %s194
        %s196 = sand.u32 %s76, 1
        %s197 = smul.addr %s196, 16
        %s198 = scalar_lea.vmem [#allocation5], %s197
        %p199 = pneg %p89
        %p200 = pneg %p86
        %p201 = pneg %p115
        %p202 = pneg %p112
        %p203 = scmp.lt.s32.totalorder %s22, 0
        %s204 = scalar_select %p203, %s22, 0
        %s205 = smul.addr %s204, 8
        %s206 = scalar_lea.vmem %s2, %s205
        %s207 = smul.u32 2, %s24
        %s208 = smul.u32 %s24, %s23
        %s209 = smul.u32 2, %s208
        %p210 = scmp.lt.s32.totalorder %s22, 0
        %s211 = scalar_select %p210, %s22, 0
        %s212 = smul.addr %s211, 8
        %s213 = scalar_lea.vmem %s2, %s212
        %p214 = scmp.eq.s32.totalorder %s23, 0
        %p215 = scmp.eq.s32.totalorder %s24, 0
        %p216 = pnand %p214, %p215
        %p217 = pneg %p216
        // Predicated region
        $region37: #{tpu_custom_call.1} parent=27 // pred_check
          _
        $region38: #{tpu_custom_call.1} parent=27 // pred_check_branch
          %219 = sbr.rel (%p216) target = $region40
        $region39: #{tpu_custom_call.1} parent=27 // pred_region
          %vm220 = vcmask 7168
          %221 = vst.msk [vmem:[%s213] sm:$0xff] %vm220, 0.0
          %222 = vst.msk [vmem:[#allocation2] sm:$0xff] %vm220, -inf
        $region40: #{tpu_custom_call.1} parent=27 // pred_fallthru
          _
        // Predicated region
        $region41: #{tpu_custom_call.1} parent=27 // pred_check
          %p223 = pneg %p214
        $region42: #{tpu_custom_call.1} parent=27 // pred_check_branch
          %225 = sbr.rel (%p223) target = $region44
        $region43: #{tpu_custom_call.1} parent=27 // pred_region
          %v226 = vld [vmem:[#allocation3] sm:$0xff]
          %v227 = vld [vmem:[#allocation3 + $0x8] sm:$0xff]
          %v228 = vld [vmem:[#allocation2] sm:$0xff]
          %v229 = vmax.f32 %v226, %v227
          %230 = vmax.xlane.f32.xlu0 %v229
          %v231 = vpop.xlane.xlu0 %230
          %v232 = vmax.f32 %v228, %v231
          %vm233 = vcmask 7168
          %234 = vst.msk [vmem:[#allocation2] sm:$0xff] %vm233, %v232
        $region44: #{tpu_custom_call.1} parent=27 // pred_fallthru
          _
        // Predicated region
        $region45: #{tpu_custom_call.1} parent=27 // pred_check
          _
        $region46: #{tpu_custom_call.1} parent=27 // pred_check_branch
          %236 = sbr.rel (%p216) target = $region48
        $region47: #{tpu_custom_call.1} parent=27 // pred_region
          %v237 = vld [vmem:[#allocation2] sm:$0xff]
          %v238 = vadd.f32 %v237, 1e-06
          %v239 = vrcp.pop %v238
          %v240 = vmul.f32 1.0, %v239
          %vm241 = vcmask 7168
          %242 = vst.msk [vmem:[#allocation2] sm:$0xff] %vm241, %v240
        $region48: #{tpu_custom_call.1} parent=27 // pred_fallthru
          _
        %p243 = scmp.eq.s32.totalorder %s23, 1
        // Predicated region
        $region49: #{tpu_custom_call.1} parent=27 // pred_check
          %p244 = pneg %p243
        $region50: #{tpu_custom_call.1} parent=27 // pred_check_branch
          %246 = sbr.rel (%p244) target = $region52
        $region51: #{tpu_custom_call.1} parent=27 // pred_region
          %v247 = vld [vmem:[#allocation3] sm:$0xff]
          %v248 = vld [vmem:[#allocation3 + $0x8] sm:$0xff]
          %v249 = vld [vmem:[%s187] sm:$0xff]
          %v250 = vld [vmem:[%s187 + $0x8] sm:$0xff]
          %v251 = vld [vmem:[#allocation2] sm:$0xff]
          %253 = vset.pattern.permute.xlu0 0
          %254 = vperm.xlu0 %253, %v251
          %v255 = vpop.permute.xlu0 %254
          %v257 = vmul.f32 %v247, %v255
          %v258 = vmul.f32 %v248, %v255
          %v259 = vmul.f32 %v257, %v249
          %v260 = vmul.f32 %v258, %v250
          %v261 = vsub.f32 %v249, %v259
          %v262 = vsub.f32 %v250, %v260
          %v263 = vmul.f32 %v261, %v261
          %v264 = vmul.f32 %v262, %v262
          %v265 = vld [vmem:[%s213] sm:$0xff]
          %v266 = vmax.f32 %v263, %v264
          %267 = vmax.xlane.f32.xlu0 %v266
          %v268 = vpop.xlane.xlu0 %267
          %v269 = vmax.f32 %v265, %v268
          %vm270 = vcmask 7168
          %271 = vst.msk [vmem:[%s213] sm:$0xff] %vm270, %v269
        $region52: #{tpu_custom_call.1} parent=27 // pred_fallthru
          _
        %p272 = scmp.lt.s32.totalorder %s22, 0
        %s273 = scalar_select %p272, %s22, 0
        %s274 = smul.addr %s273, 8
        %s275 = scalar_lea.vmem %s2, %s274
        // Predicated region
        $region53: #{tpu_custom_call.1} parent=27 // pred_check
          %p276 = pneg %p112
        $region54: #{tpu_custom_call.1} parent=27 // pred_check_branch
          %278 = sbr.rel (%p276) target = $region56
        $region55: #{tpu_custom_call.1} parent=27 // pred_region
          _
        $region56: #{tpu_custom_call.1} parent=27 // pred_fallthru
          _
        // Predicated region
        $region57: #{tpu_custom_call.1} parent=27 // pred_check
          %p279 = pneg %p112
        $region58: #{tpu_custom_call.1} parent=27 // pred_check_branch
          %281 = sbr.rel (%p279) target = $region60
        $region59: #{tpu_custom_call.1} parent=27 // pred_region
          %p282 = scmp.lt.s32.totalorder %s22, 0
          %s283 = scalar_select %p282, %s22, 0
          %s284 = smul.addr %s283, 8
          %s285 = scalar_lea.vmem %s2, %s284
        $region60: #{tpu_custom_call.1} parent=27 // pred_fallthru
          _
      $region28: #{tpu_custom_call.1} parent=5 // pred_fallthru
        _
      %p286 = scmp.le.s32.totalorder 2, %s12
      // Predicated region
      $region61: #{tpu_custom_call.1} parent=5 // pred_check
        %p287 = pneg %p286
      $region62: #{tpu_custom_call.1} parent=5 // pred_check_branch
        %289 = sbr.rel (%p287) target = $region64
      $region63: #{tpu_custom_call.1} parent=5 // pred_region
        %s290 = ssub.s32 %s12, 2
      $region64: #{tpu_custom_call.1} parent=5 // pred_fallthru
        _
    $region6: #{tpu_custom_call.1} parent=1 // loop_footer
      %s16 = sadd.s32 1, %s12
    $region7: #{tpu_custom_call.1} parent=1 // loop_footer_branch
      %11 = sbr.rel target = $region3
    $region8: #{tpu_custom_call.1} parent=1 // loop_exit
      _
    %291 = vsyncpa [#allocation4], 1
    %s292 = scalar_lea.sflag [#allocation4], 1
    %293 = vsyncpa %s292, 1
    %294 = vsyncpa [#allocation6], 1
    %s295 = scalar_lea.sflag [#allocation6], 1
    %296 = vsyncpa %s295, 1

</llo_original>
